<compile_context>
chip_gen: v7x
topology: tpu7x:2x2x1
jax: 0.10.0
libtpu: 0.0.40
codegen_flags: <defaults>
</compile_context>

<pallas_src>
import functools

import jax
import jax.numpy as jnp
from jax.experimental import pallas as pl
from jax.experimental.pallas import tpu as pltpu


def _round_up(n, m):
    return (n + m - 1) // m * m


def _tpu_vmem_capacity_bytes():
    """Per-TensorCore VMEM capacity; conservative (v7x-sized) fallback if unknown."""
    try:
        info = pltpu.get_tpu_info()
        return int(getattr(info, "vmem_capacity_bytes", 64 << 20))
    except Exception:  # not on TPU / older API -> be conservative
        return 64 << 20


def _stacked_encoder_kernel(x_ref, y_ref, eps_ref, wx_ref, wy_ref, b_ref,
                            z_ref, mu_ref, sigma_ref, *, z_dim, zp):
    # Fused two-headed dense layer, split per input so no activation concat / K padding
    # is needed:   h = [mu | log_sigma](padded heads) = x @ Wx + y @ Wy + b
    h = (jnp.dot(x_ref[...], wx_ref[...], preferred_element_type=jnp.float32)
         + jnp.dot(y_ref[...], wy_ref[...], preferred_element_type=jnp.float32)
         + b_ref[...])                                   # (tile_b, 2*zp) f32

    mu = h[:, :z_dim]                                    # lanes [0, Z)
    sigma = jnp.exp(h[:, zp:zp + z_dim])                 # lanes [Zp, Zp+Z): aligned start
    z = mu + sigma * eps_ref[...]                        # reparameterization (f32)

    z_ref[...] = z.astype(z_ref.dtype)
    mu_ref[...] = mu.astype(mu_ref.dtype)
    sigma_ref[...] = sigma.astype(sigma_ref.dtype)


def stacked_encoder_forward(x, y, w_mu, b_mu, w_ls, b_ls, eps,
                            matmul_dtype=jnp.float32):
    """x: (B, C, L) float32, y: (B, num_classes) one-hot float32.
    Weights are (D_in, Z) with row order [flattened-x features ; y features]
    (matches torch.cat((x, y), dim=-1)).  Returns (z, mu, sigma), each (B, Z)."""
    B = x.shape[0]
    x_flat = x.reshape(B, -1)                # `core` = Flatten: a view, no HBM copy
    Dx = x_flat.shape[1]
    Dy = y.shape[1]
    Z = w_mu.shape[1]
    assert w_mu.shape[0] == Dx + Dy and w_ls.shape[0] == Dx + Dy

    Zp = _round_up(Z, 128)                   # per-head lane padding (weights/bias only)

    # ---- generation-aware batch tiling -------------------------------------------
    vmem_cap = _tpu_vmem_capacity_bytes()
    if vmem_cap >= (100 << 20):              # v5e / v6e: 128 MiB VMEM per TensorCore
        tile_cap, limit_cap = 8192, 96 << 20
    else:                                    # v7x (64 MiB physical) or unknown
        tile_cap, limit_cap = 2048, 40 << 20

    Bp8 = _round_up(B, 8)
    if Bp8 <= tile_cap:
        if Bp8 >= 1024:                      # >=2 grid steps -> both v7x TCs get work
            tile_b = _round_up(Bp8, 16) // 2
        else:
            tile_b = Bp8                     # tiny batch: single grid step
    else:
        tile_b = tile_cap
    tile_b = max(8, tile_b)
    Bp = _round_up(B, tile_b)
    grid = (Bp // tile_b,)

    # ---- operand preparation (only tiny, resident weight/bias slabs are padded) ---
    def pad_rows(a, rows):
        return a if a.shape[0] == rows else jnp.pad(a, ((0, rows - a.shape[0]), (0, 0)))

    def pad_lanes(a, n):
        return a if a.shape[1] == n else jnp.pad(a, ((0, 0), (0, n - a.shape[1])))

    xp = pad_rows(x_flat, Bp).astype(matmul_dtype)       # (Bp, Dx)  -- unpadded K
    yp = pad_rows(y, Bp).astype(matmul_dtype)            # (Bp, Dy)  -- unpadded K
    epsp = pad_rows(eps, Bp)                             # (Bp, Z)   -- unpadded lanes

    wmu = w_mu.astype(matmul_dtype)
    wls = w_ls.astype(matmul_dtype)
    w_x = jnp.concatenate([pad_lanes(wmu[:Dx], Zp), pad_lanes(wls[:Dx], Zp)], axis=1)
    w_y = jnp.concatenate([pad_lanes(wmu[Dx:], Zp), pad_lanes(wls[Dx:], Zp)], axis=1)
    b = jnp.concatenate([pad_lanes(b_mu.reshape(1, Z).astype(jnp.float32), Zp),
                         pad_lanes(b_ls.reshape(1, Z).astype(jnp.float32), Zp)], axis=1)

    # ---- VMEM budget (double-buffered tiles are lane-padded to 128 inside VMEM) ---
    itemsize = jnp.dtype(matmul_dtype).itemsize
    lane = lambda n: _round_up(max(n, 1), 128)
    tile_bytes = tile_b * (itemsize * (lane(Dx) + lane(Dy))      # x, y tiles
                           + 4 * lane(Z)                         # eps tile
                           + 4 * 3 * lane(Z))                    # z / mu / sigma tiles
    weight_bytes = (itemsize * (_round_up(Dx, 8) + _round_up(Dy, 8)) * 2 * Zp
                    + 4 * 8 * 2 * Zp)                            # resident weights + bias
    vmem_need = 2 * (tile_bytes + weight_bytes)
    vmem_limit = int(min(max(1.25 * vmem_need + (2 << 20), 4 << 20), limit_cap))

    cost = pl.CostEstimate(
        flops=2 * Bp * (Dx + Dy) * 2 * Zp,
        transcendentals=Bp * Z,
        bytes_accessed=(itemsize * (Bp * (Dx + Dy) + (Dx + Dy) * 2 * Zp)
                        + 4 * (2 * Zp + Bp * Z + 3 * Bp * Z)),
    )

    out_spec = pl.BlockSpec((tile_b, Z), lambda i: (i, 0))
    z_p, mu_p, sigma_p = pl.pallas_call(
        functools.partial(_stacked_encoder_kernel, z_dim=Z, zp=Zp),
        out_shape=(jax.ShapeDtypeStruct((Bp, Z), jnp.float32),
                   jax.ShapeDtypeStruct((Bp, Z), jnp.float32),
                   jax.ShapeDtypeStruct((Bp, Z), jnp.float32)),
        grid=grid,
        in_specs=[
            pl.BlockSpec((tile_b, Dx), lambda i: (i, 0)),        # x:   batch-tiled, full K
            pl.BlockSpec((tile_b, Dy), lambda i: (i, 0)),        # y:   batch-tiled, full K
            pl.BlockSpec((tile_b, Z), lambda i: (i, 0)),         # eps: batch-tiled, full Z
            pl.BlockSpec((Dx, 2 * Zp), lambda i: (0, 0)),        # Wx slab: resident
            pl.BlockSpec((Dy, 2 * Zp), lambda i: (0, 0)),        # Wy slab: resident
            pl.BlockSpec((1, 2 * Zp), lambda i: (0, 0)),         # bias slab: resident
        ],
        out_specs=(out_spec, out_spec, out_spec),
        compiler_params=pltpu.CompilerParams(
            dimension_semantics=("parallel",),
            vmem_limit_bytes=vmem_limit,
        ),
        cost_estimate=cost,
    )(xp, yp, epsp, w_x, w_y, b)

    return z_p[:B], mu_p[:B], sigma_p[:B]


if __name__ == "__main__":
    key = jax.random.PRNGKey(0)
    B, C, L, NC, Z = 8, 3, 10, 4, 3          # small shapes, mirrors the module's usage
    kx, ky, kwmu, kbmu, kwls, kbls, keps = jax.random.split(key, 7)

    x = jax.random.normal(kx, (B, C, L), jnp.float32)
    labels = jax.random.randint(ky, (B,), 0, NC)
    y = jnp.eye(NC, dtype=jnp.float32)[labels]           # one-hot labels

    D_in = C * L + NC                                    # Flatten(C*L) ++ one-hot(NC)
    bound = 1.0 / (D_in ** 0.5)                          # PyTorch nn.Linear-style init
    w_mu = jax.random.uniform(kwmu, (D_in, Z), jnp.float32, -bound, bound)
    b_mu = jax.random.uniform(kbmu, (Z,), jnp.float32, -bound, bound)
    w_ls = jax.random.uniform(kwls, (D_in, Z), jnp.float32, -bound, bound)
    b_ls = jax.random.uniform(kbls, (Z,), jnp.float32, -bound, bound)
    eps = jax.random.normal(keps, (B, Z), jnp.float32)   # reparameterization noise

    z, mu, sigma = stacked_encoder_forward(x, y, w_mu, b_mu, w_ls, b_ls, eps)
    jax.block_until_ready((z, mu, sigma))

    # Pure-JAX reference (concat + two-headed dense + reparameterization).
    xy = jnp.concatenate([x.reshape(B, -1), y], axis=-1)
    mu_r = xy @ w_mu + b_mu
    sigma_r = jnp.exp(xy @ w_ls + b_ls)
    z_r = mu_r + sigma_r * eps

    assert z.shape == (B, Z) and mu.shape == (B, Z) and sigma.shape == (B, Z)
    assert jnp.allclose(mu, mu_r, atol=1e-5)
    assert jnp.allclose(sigma, sigma_r, atol=1e-5)
    assert jnp.allclose(z, z_r, atol=1e-5)

    print("KERNEL_OK")
</pallas_src>

<mosaic_0001>
module attributes {stable_mosaic.version = 11 : i64} {
  func.func @_stacked_encoder_kernel(%arg0: i32, %arg1: memref<8x30xf32, #tpu.memory_space<vmem>>, %arg2: memref<8x4xf32, #tpu.memory_space<vmem>>, %arg3: memref<8x3xf32, #tpu.memory_space<vmem>>, %arg4: memref<30x256xf32, #tpu.memory_space<vmem>>, %arg5: memref<4x256xf32, #tpu.memory_space<vmem>>, %arg6: memref<1x256xf32, #tpu.memory_space<vmem>>, %arg7: memref<8x3xf32, #tpu.memory_space<vmem>>, %arg8: memref<8x3xf32, #tpu.memory_space<vmem>>, %arg9: memref<8x3xf32, #tpu.memory_space<vmem>>) attributes {dimension_semantics = [#tpu.dimension_semantics<parallel>], iteration_bounds = array<i64: 1>, scalar_prefetch = 0 : i64, scratch_operands = 0 : i64, tpu.core_type = #tpu.core_type<tc>, window_params = [{transform_indices = @transform_0, window_bounds = array<i64: 8, 30>}, {transform_indices = @transform_1, window_bounds = array<i64: 8, 4>}, {transform_indices = @transform_2, window_bounds = array<i64: 8, 3>}, {pipeline_mode = #tpu.pipeline_mode<synchronous>, transform_indices = @transform_3, window_bounds = array<i64: 30, 256>}, {pipeline_mode = #tpu.pipeline_mode<synchronous>, transform_indices = @transform_4, window_bounds = array<i64: 4, 256>}, {pipeline_mode = #tpu.pipeline_mode<synchronous>, transform_indices = @transform_5, window_bounds = array<i64: 1, 256>}, {transform_indices = @transform_6, window_bounds = array<i64: 8, 3>}, {transform_indices = @transform_7, window_bounds = array<i64: 8, 3>}, {transform_indices = @transform_8, window_bounds = array<i64: 8, 3>}]} {
    %c0 = arith.constant 0 : index
    %c0_0 = arith.constant 0 : index
    %0 = vector.load %arg1[%c0, %c0_0] : memref<8x30xf32, #tpu.memory_space<vmem>>, vector<8x30xf32>
    %c0_1 = arith.constant 0 : index
    %c0_2 = arith.constant 0 : index
    %1 = vector.load %arg4[%c0_1, %c0_2] : memref<30x256xf32, #tpu.memory_space<vmem>>, vector<30x256xf32>
    %cst = arith.constant dense<0.000000e+00> : vector<8x256xf32>
    %2 = tpu.matmul %0, %1, %cst {dimension_numbers = #tpu.dot_dimension_numbers<[1], [0], [0], [1], [0, 0, 1, 1], [], []>} : vector<8x30xf32>, vector<30x256xf32>, vector<8x256xf32> -> vector<8x256xf32>
    %c0_3 = arith.constant 0 : index
    %c0_4 = arith.constant 0 : index
    %3 = vector.load %arg2[%c0_3, %c0_4] : memref<8x4xf32, #tpu.memory_space<vmem>>, vector<8x4xf32>
    %c0_5 = arith.constant 0 : index
    %c0_6 = arith.constant 0 : index
    %4 = vector.load %arg5[%c0_5, %c0_6] : memref<4x256xf32, #tpu.memory_space<vmem>>, vector<4x256xf32>
    %cst_7 = arith.constant dense<0.000000e+00> : vector<8x256xf32>
    %5 = tpu.matmul %3, %4, %cst_7 {dimension_numbers = #tpu.dot_dimension_numbers<[1], [0], [0], [1], [0, 0, 1, 1], [], []>} : vector<8x4xf32>, vector<4x256xf32>, vector<8x256xf32> -> vector<8x256xf32>
    %6 = arith.addf %2, %5 : vector<8x256xf32>
    %c0_8 = arith.constant 0 : index
    %c0_9 = arith.constant 0 : index
    %7 = vector.load %arg6[%c0_8, %c0_9] : memref<1x256xf32, #tpu.memory_space<vmem>>, vector<1x256xf32>
    %8 = vector.broadcast %7 : vector<1x256xf32> to vector<8x256xf32>
    %9 = arith.addf %6, %8 : vector<8x256xf32>
    %10 = vector.extract_strided_slice %9 {offsets = [0, 0], sizes = [8, 3], strides = [1, 1]} : vector<8x256xf32> to vector<8x3xf32>
    %11 = vector.extract_strided_slice %9 {offsets = [0, 128], sizes = [8, 3], strides = [1, 1]} : vector<8x256xf32> to vector<8x3xf32>
    %12 = math.exp %11 : vector<8x3xf32>
    %c0_10 = arith.constant 0 : index
    %c0_11 = arith.constant 0 : index
    %13 = vector.load %arg3[%c0_10, %c0_11] : memref<8x3xf32, #tpu.memory_space<vmem>>, vector<8x3xf32>
    %14 = arith.mulf %12, %13 : vector<8x3xf32>
    %15 = arith.addf %10, %14 : vector<8x3xf32>
    %c0_12 = arith.constant 0 : index
    %c0_13 = arith.constant 0 : index
    %16 = vector.load %arg7[%c0_12, %c0_13] : memref<8x3xf32, #tpu.memory_space<vmem>>, vector<8x3xf32>
    tpu.vector_store %arg7[%c0_12, %c0_13], %15 {strides = array<i32>} : memref<8x3xf32, #tpu.memory_space<vmem>>, vector<8x3xf32>,
    %c0_14 = arith.constant 0 : index
    %c0_15 = arith.constant 0 : index
    %17 = vector.load %arg8[%c0_14, %c0_15] : memref<8x3xf32, #tpu.memory_space<vmem>>, vector<8x3xf32>
    tpu.vector_store %arg8[%c0_14, %c0_15], %10 {strides = array<i32>} : memref<8x3xf32, #tpu.memory_space<vmem>>, vector<8x3xf32>,
    %c0_16 = arith.constant 0 : index
    %c0_17 = arith.constant 0 : index
    %18 = vector.load %arg9[%c0_16, %c0_17] : memref<8x3xf32, #tpu.memory_space<vmem>>, vector<8x3xf32>
    tpu.vector_store %arg9[%c0_16, %c0_17], %12 {strides = array<i32>} : memref<8x3xf32, #tpu.memory_space<vmem>>, vector<8x3xf32>,
    return
  }
  func.func @transform_0(%arg0: i32) -> (i32, i32) {
    %c0_i32 = arith.constant 0 : i32
    %c0_i32_0 = arith.constant 0 : i32
    return %arg0, %c0_i32 : i32, i32
  }
  func.func @transform_1(%arg0: i32) -> (i32, i32) {
    %c0_i32 = arith.constant 0 : i32
    %c0_i32_0 = arith.constant 0 : i32
    return %arg0, %c0_i32 : i32, i32
  }
  func.func @transform_2(%arg0: i32) -> (i32, i32) {
    %c0_i32 = arith.constant 0 : i32
    %c0_i32_0 = arith.constant 0 : i32
    return %arg0, %c0_i32 : i32, i32
  }
  func.func @transform_3(%arg0: i32) -> (i32, i32) {
    %c0_i32 = arith.constant 0 : i32
    %c0_i32_0 = arith.constant 0 : i32
    %c0_i32_1 = arith.constant 0 : i32
    return %c0_i32, %c0_i32_0 : i32, i32
  }
  func.func @transform_4(%arg0: i32) -> (i32, i32) {
    %c0_i32 = arith.constant 0 : i32
    %c0_i32_0 = arith.constant 0 : i32
    %c0_i32_1 = arith.constant 0 : i32
    return %c0_i32, %c0_i32_0 : i32, i32
  }
  func.func @transform_5(%arg0: i32) -> (i32, i32) {
    %c0_i32 = arith.constant 0 : i32
    %c0_i32_0 = arith.constant 0 : i32
    %c0_i32_1 = arith.constant 0 : i32
    return %c0_i32, %c0_i32_0 : i32, i32
  }
  func.func @transform_6(%arg0: i32) -> (i32, i32) {
    %c0_i32 = arith.constant 0 : i32
    %c0_i32_0 = arith.constant 0 : i32
    return %arg0, %c0_i32 : i32, i32
  }
  func.func @transform_7(%arg0: i32) -> (i32, i32) {
    %c0_i32 = arith.constant 0 : i32
    %c0_i32_0 = arith.constant 0 : i32
    return %arg0, %c0_i32 : i32, i32
  }
  func.func @transform_8(%arg0: i32) -> (i32, i32) {
    %c0_i32 = arith.constant 0 : i32
    %c0_i32_0 = arith.constant 0 : i32
    return %arg0, %c0_i32 : i32, i32
  }
}

</mosaic_0001>

<llo_original>
// kernel: tpu_custom_call.1
$region0: #{tpu_custom_call.1}
  #allocation0 [shape = 'u32[]', space=smem, size = 0x4, offset = 0x4, fixed_abs, tag = 'smem constant byte address 0x4 - core index']
  #allocation1 [shape = 'u32[144,128]{1,0:T(1,128)}', space=vmem, size = 0x12000, scoped, tag = 'internal scratch']
  %s0 = inlined_call_operand.vmem [shape: f32[8,30], index: 0, kind: input, shape index: {}]
  %s1 = inlined_call_operand.vmem [shape: f32[8,4], index: 1, kind: input, shape index: {}]
  %s2 = inlined_call_operand.vmem [shape: f32[8,3], index: 2, kind: input, shape index: {}]
  %s3 = inlined_call_operand.hbm [shape: f32[30,256], index: 3, kind: input, shape index: {}]
  %s4 = inlined_call_operand.vmem [shape: f32[4,256], index: 4, kind: input, shape index: {}]
  %s5 = inlined_call_operand.vmem [shape: f32[1,256], index: 5, kind: input, shape index: {}]
  %s6 = inlined_call_operand.vmem [shape: f32[8,3], index: 6, kind: output, shape index: {0}]
  %s7 = inlined_call_operand.vmem [shape: f32[8,3], index: 7, kind: output, shape index: {1}]
  %s8 = inlined_call_operand.vmem [shape: f32[8,3], index: 8, kind: output, shape index: {2}]
  %9 = xla_tuple %s6, %s7, %s8
  %s10 = sld [smem:[#allocation0]]
  $region54: #{tpu_custom_call.1} parent=0
    _
  %s12 = ssub.s32 1, %s10
  %s13 = scalar_select 0, %s12, %s10
  $region1: #{tpu_custom_call.1} parent=0
    #allocation2 [shape = 'u8[32768]{0}', space=vmem, size = 0x8000, scoped, tag = 'input window, operand 3, single buffered']
    #allocation3 [shape = 's32[1]{0}', space=sflag, size = 0x4, scoped, tag = 'scoped memory for tpu_custom_call.1']
    %14 = vsyncpa [#allocation3], 0
    // Predicated region
    $region2: #{tpu_custom_call.1} parent=1 // pred_check
      _
    $region3: #{tpu_custom_call.1} parent=1 // pred_check_branch
      %16 = sbr.rel (0) target = $region5
    $region4: #{tpu_custom_call.1} parent=1 // pred_region
      _
    $region5: #{tpu_custom_call.1} parent=1 // pred_fallthru
      _
    // Predicated region
    $region6: #{tpu_custom_call.1} parent=1 // pred_check
      _
    $region7: #{tpu_custom_call.1} parent=1 // pred_check_branch
      %18 = sbr.rel (0) target = $region9
    $region8: #{tpu_custom_call.1} parent=1 // pred_region
      _
    $region9: #{tpu_custom_call.1} parent=1 // pred_fallthru
      _
    // Predicated region
    $region10: #{tpu_custom_call.1} parent=1 // pred_check
      _
    $region11: #{tpu_custom_call.1} parent=1 // pred_check_branch
      %20 = sbr.rel (0) target = $region13
    $region12: #{tpu_custom_call.1} parent=1 // pred_region
      _
    $region13: #{tpu_custom_call.1} parent=1 // pred_fallthru
      _
    // Predicated region
    $region14: #{tpu_custom_call.1} parent=1 // pred_check
      _
    $region15: #{tpu_custom_call.1} parent=1 // pred_check_branch
      %22 = sbr.rel (0) target = $region17
    $region16: #{tpu_custom_call.1} parent=1 // pred_region
      %s24 = ssub.s32 1024, 1024
      %25 = vsyncadd [#allocation3], %s24
      %s26 = sshll.u32 [#allocation2], 4
      %s27 = int_to_ptr.vmem [resolvable:$true] %s26
      %32 = dma.hbm_to_vmem [thread:$0]  %s3, 1024, %s27, [#allocation3], 256, 256, 16
    $region17: #{tpu_custom_call.1} parent=1 // pred_fallthru
      _
    // Predicated region
    $region18: #{tpu_custom_call.1} parent=1 // pred_check
      _
    $region19: #{tpu_custom_call.1} parent=1 // pred_check_branch
      %34 = sbr.rel (0) target = $region21
    $region20: #{tpu_custom_call.1} parent=1 // pred_region
      _
    $region21: #{tpu_custom_call.1} parent=1 // pred_fallthru
      _
    // Predicated region
    $region22: #{tpu_custom_call.1} parent=1 // pred_check
      _
    $region23: #{tpu_custom_call.1} parent=1 // pred_check_branch
      %36 = sbr.rel (0) target = $region25
    $region24: #{tpu_custom_call.1} parent=1 // pred_region
      _
    $region25: #{tpu_custom_call.1} parent=1 // pred_fallthru
      _
    // Predicated region
    $region26: #{tpu_custom_call.1} parent=1 // pred_check
      _
    $region27: #{tpu_custom_call.1} parent=1 // pred_check_branch
      %38 = sbr.rel (0) target = $region29
    $region28: #{tpu_custom_call.1} parent=1 // pred_region
      %39 = dma.done [#allocation3], 1024
    $region29: #{tpu_custom_call.1} parent=1 // pred_fallthru
      _
    %v40 = vld [vmem:[%s0] sm:$0xff]
    %v41 = vld [vmem:[#allocation2] sm:$0xff]
    %v42 = vld [vmem:[#allocation2 + $0x8] sm:$0xff]
    %v43 = vld [vmem:[#allocation2 + $0x10] sm:$0xff]
    %v44 = vld [vmem:[#allocation2 + $0x18] sm:$0xff]
    %v45 = vld [vmem:[#allocation2 + $0x20] sm:$0xff]
    %v46 = vld [vmem:[#allocation2 + $0x28] sm:$0xff]
    %v47 = vld [vmem:[#allocation2 + $0x30] sm:$0x3f]
    %v48 = vld [vmem:[#allocation2 + $0x38] sm:$0x3f]
    %v49 = vld [vmem:[%s1] sm:$0xff]
    %v50 = vld [vmem:[%s4] sm:$0xff]
    %v52 = vcombine.high %v50, %v50
    %vm53 = vcmask 31744
    %v55 = vsel %vm53, %v49, 0
    %vm57 = vcmask 1043456
    %v58 = vsel %vm57, %v50, 0
    %v60 = vsel %vm57, %v52, 0
    %62 = vmatprep.subr.mxu0 %v60
    %63 = vmatpush1.msra.mxu0 %v58
    %64 = vmatprep.subr.mxu0 0.0
    %65 = vmatpush1.msra.mxu0 0.0
    %66 = vmatprep.subr.mxu0 0.0
    %67 = vmatpush1.msra.mxu0 0.0
    %68 = vmatprep.subr.mxu0 0.0
    %69 = vmatpush1.msra.mxu0 0.0
    %70 = vmatprep.subr.mxu0 0.0
    %71 = vmatpush1.msra.mxu0 0.0
    %72 = vmatprep.subr.mxu0 0.0
    %73 = vmatpush1.msra.mxu0 0.0
    %74 = vmatprep.subr.mxu0 0.0
    %75 = vmatpush1.msra.mxu0 0.0
    %76 = vmatprep.subr.mxu0 0.0
    %77 = vmatpush1.msra.mxu0 0.0
    %78 = vmatprep.subr.mxu0 0.0
    %79 = vmatpush1.msra.mxu0 0.0
    %80 = vmatprep.subr.mxu0 0.0
    %81 = vmatpush1.msra.mxu0 0.0
    %82 = vmatprep.subr.mxu0 0.0
    %83 = vmatpush1.msra.mxu0 0.0
    %84 = vmatprep.subr.mxu0 0.0
    %85 = vmatpush1.msra.mxu0 0.0
    %86 = vmatprep.subr.mxu0 0.0
    %87 = vmatpush1.msra.mxu0 0.0
    %88 = vmatprep.subr.mxu0 0.0
    %89 = vmatpush1.msra.mxu0 0.0
    %90 = vmatprep.subr.mxu0 0.0
    %91 = vmatpush1.msra.mxu0 0.0
    %92 = vmatprep.subr.mxu0 0.0
    %93 = vmatpush1.msra.mxu0 0.0
    %94 = vmatprep.subr.mxu0 0.0
    %95 = vmatpush1.msra.mxu0 0.0
    %96 = vmatprep.subr.mxu0 0.0
    %97 = vmatpush1.msra.mxu0 0.0
    %98 = vmatprep.subr.mxu0 0.0
    %99 = vmatpush1.msra.mxu0 0.0
    %100 = vmatprep.subr.mxu0 0.0
    %101 = vmatpush1.msra.mxu0 0.0
    %102 = vmatprep.subr.mxu0 0.0
    %103 = vmatpush1.msra.mxu0 0.0
    %104 = vmatprep.subr.mxu0 0.0
    %105 = vmatpush1.msra.mxu0 0.0
    %106 = vmatprep.subr.mxu0 0.0
    %107 = vmatpush1.msra.mxu0 0.0
    %108 = vmatprep.subr.mxu0 0.0
    %109 = vmatpush1.msra.mxu0 0.0
    %110 = vmatprep.subr.mxu0 0.0
    %111 = vmatpush1.msra.mxu0 0.0
    %112 = vmatprep.subr.mxu0 0.0
    %113 = vmatpush1.msra.mxu0 0.0
    %114 = vmatprep.subr.mxu0 0.0
    %115 = vmatpush1.msra.mxu0 0.0
    %116 = vmatprep.subr.mxu0 0.0
    %117 = vmatpush1.msra.mxu0 0.0
    %118 = vmatprep.subr.mxu0 0.0
    %119 = vmatpush1.msra.mxu0 0.0
    %120 = vmatprep.subr.mxu0 0.0
    %121 = vmatpush1.msra.mxu0 0.0
    %122 = vmatprep.subr.mxu0 0.0
    %123 = vmatpush1.msra.mxu0 0.0
    %124 = vmatprep.subr.mxu0 0.0
    %125 = vmatpush1.msra.mxu0 0.0
    %126 = vmatprep.mubr.f32.mxu0 0.0
    %127 = vmatmul.mubr.f32.gmra.mrb[0].mxu0 %v55
    %v128 = vpop.f32.mrb[0].mxu0
    %v129 = vadd.f32 0.0, %v128
    %v130 = vpop.f32.mrb[0].mxu0
    %v131 = vadd.f32 0.0, %v130
    %132 = vdwg.mxu0
    %vm133 = vcmask 244736
    %v135 = vsel %vm133, %v40, 0
    %vm137 = vcmask 1045504
    %v139 = vsel %vm137, %v47, 0
    %v142 = vsel %vm137, %v48, 0
    %144 = vmatprep.subr.mxu0 %v42
    %145 = vmatpush1.msra.mxu0 %v41
    %146 = vmatprep.subr.mxu0 %v44
    %147 = vmatpush1.msra.mxu0 %v43
    %148 = vmatprep.subr.mxu0 %v46
    %149 = vmatpush1.msra.mxu0 %v45
    %150 = vmatprep.subr.mxu0 %v142
    %151 = vmatpush1.msra.mxu0 %v139
    %152 = vmatprep.subr.mxu0 0.0
    %153 = vmatpush1.msra.mxu0 0.0
    %154 = vmatprep.subr.mxu0 0.0
    %155 = vmatpush1.msra.mxu0 0.0
    %156 = vmatprep.subr.mxu0 0.0
    %157 = vmatpush1.msra.mxu0 0.0
    %158 = vmatprep.subr.mxu0 0.0
    %159 = vmatpush1.msra.mxu0 0.0
    %160 = vmatprep.subr.mxu0 0.0
    %161 = vmatpush1.msra.mxu0 0.0
    %162 = vmatprep.subr.mxu0 0.0
    %163 = vmatpush1.msra.mxu0 0.0
    %164 = vmatprep.subr.mxu0 0.0
    %165 = vmatpush1.msra.mxu0 0.0
    %166 = vmatprep.subr.mxu0 0.0
    %167 = vmatpush1.msra.mxu0 0.0
    %168 = vmatprep.subr.mxu0 0.0
    %169 = vmatpush1.msra.mxu0 0.0
    %170 = vmatprep.subr.mxu0 0.0
    %171 = vmatpush1.msra.mxu0 0.0
    %172 = vmatprep.subr.mxu0 0.0
    %173 = vmatpush1.msra.mxu0 0.0
    %174 = vmatprep.subr.mxu0 0.0
    %175 = vmatpush1.msra.mxu0 0.0
    %176 = vmatprep.subr.mxu0 0.0
    %177 = vmatpush1.msra.mxu0 0.0
    %178 = vmatprep.subr.mxu0 0.0
    %179 = vmatpush1.msra.mxu0 0.0
    %180 = vmatprep.subr.mxu0 0.0
    %181 = vmatpush1.msra.mxu0 0.0
    %182 = vmatprep.subr.mxu0 0.0
    %183 = vmatpush1.msra.mxu0 0.0
    %184 = vmatprep.subr.mxu0 0.0
    %185 = vmatpush1.msra.mxu0 0.0
    %186 = vmatprep.subr.mxu0 0.0
    %187 = vmatpush1.msra.mxu0 0.0
    %188 = vmatprep.subr.mxu0 0.0
    %189 = vmatpush1.msra.mxu0 0.0
    %190 = vmatprep.subr.mxu0 0.0
    %191 = vmatpush1.msra.mxu0 0.0
    %192 = vmatprep.subr.mxu0 0.0
    %193 = vmatpush1.msra.mxu0 0.0
    %194 = vmatprep.subr.mxu0 0.0
    %195 = vmatpush1.msra.mxu0 0.0
    %196 = vmatprep.subr.mxu0 0.0
    %197 = vmatpush1.msra.mxu0 0.0
    %198 = vmatprep.subr.mxu0 0.0
    %199 = vmatpush1.msra.mxu0 0.0
    %200 = vmatprep.subr.mxu0 0.0
    %201 = vmatpush1.msra.mxu0 0.0
    %202 = vmatprep.subr.mxu0 0.0
    %203 = vmatpush1.msra.mxu0 0.0
    %204 = vmatprep.subr.mxu0 0.0
    %205 = vmatpush1.msra.mxu0 0.0
    %206 = vmatprep.subr.mxu0 0.0
    %207 = vmatpush1.msra.mxu0 0.0
    %208 = vmatprep.mubr.f32.mxu0 0.0
    %209 = vmatmul.mubr.f32.gmra.mrb[0].mxu0 %v135
    %v210 = vpop.f32.mrb[0].mxu0
    %v211 = vadd.f32 %v129, %v210
    %v212 = vpop.f32.mrb[0].mxu0
    %v213 = vadd.f32 %v131, %v212
    %214 = vdwg.mxu0
    %v215 = vld [vmem:[%s5] sm:$0x3]
    %v217 = vlaneseq
    %v218 = vshrl.u32 %v217, 7
    %v219 = vsub.s32 0, %v218
    %v220 = vrot.slane %v215, %v219
    %v221 = vlaneseq
    %v222 = vshrl.u32 %v221, 7
    %v223 = vsub.s32 1, %v222
    %v224 = vrot.slane %v215, %v223
    %v227 = vadd.f32 %v211, %v220
    %v228 = vadd.f32 %v213, %v224
    %v229 = vmul.f32 %v228, 1.442695
    %v230 = vpow.pop %v229
    %v231 = vld [vmem:[%s2] sm:$0xff]
    %v232 = vmul.f32 %v230, %v231
    %v233 = vadd.f32 %v227, %v232
    %vm234 = vcmask 23552
    %235 = vst.msk [vmem:[%s6] sm:$0xff] %vm234, %v233
    %236 = vst.msk [vmem:[%s7] sm:$0xff] %vm234, %v227
    %237 = vst.msk [vmem:[%s8] sm:$0xff] %vm234, %v230
    // Predicated region
    $region30: #{tpu_custom_call.1} parent=1 // pred_check
      _
    $region31: #{tpu_custom_call.1} parent=1 // pred_check_branch
      %239 = sbr.rel (0) target = $region33
    $region32: #{tpu_custom_call.1} parent=1 // pred_region
      _
    $region33: #{tpu_custom_call.1} parent=1 // pred_fallthru
      _
    // Predicated region
    $region34: #{tpu_custom_call.1} parent=1 // pred_check
      _
    $region35: #{tpu_custom_call.1} parent=1 // pred_check_branch
      %241 = sbr.rel (0) target = $region37
    $region36: #{tpu_custom_call.1} parent=1 // pred_region
      _
    $region37: #{tpu_custom_call.1} parent=1 // pred_fallthru
      _
    // Predicated region
    $region38: #{tpu_custom_call.1} parent=1 // pred_check
      _
    $region39: #{tpu_custom_call.1} parent=1 // pred_check_branch
      %243 = sbr.rel (0) target = $region41
    $region40: #{tpu_custom_call.1} parent=1 // pred_region
      _
    $region41: #{tpu_custom_call.1} parent=1 // pred_fallthru
      _
    // Predicated region
    $region42: #{tpu_custom_call.1} parent=1 // pred_check
      _
    $region43: #{tpu_custom_call.1} parent=1 // pred_check_branch
      %245 = sbr.rel (0) target = $region45
    $region44: #{tpu_custom_call.1} parent=1 // pred_region
      _
    $region45: #{tpu_custom_call.1} parent=1 // pred_fallthru
      _
    // Predicated region
    $region46: #{tpu_custom_call.1} parent=1 // pred_check
      _
    $region47: #{tpu_custom_call.1} parent=1 // pred_check_branch
      %247 = sbr.rel (0) target = $region49
    $region48: #{tpu_custom_call.1} parent=1 // pred_region
      _
    $region49: #{tpu_custom_call.1} parent=1 // pred_fallthru
      _
    // Predicated region
    $region50: #{tpu_custom_call.1} parent=1 // pred_check
      _
    $region51: #{tpu_custom_call.1} parent=1 // pred_check_branch
      %249 = sbr.rel (0) target = $region53
    $region52: #{tpu_custom_call.1} parent=1 // pred_region
      _
    $region53: #{tpu_custom_call.1} parent=1 // pred_fallthru
      _
    %250 = vsyncpa [#allocation3], 1

</llo_original>
